<compile_context>
chip_gen: v5e
topology: v5e:2x2
jax: 0.10.0
libtpu: 0.0.40
codegen_flags: <defaults>
</compile_context>

<pallas_src>
import jax
import jax.numpy as jnp
from jax.experimental import pallas as pl
from jax.experimental.pallas import tpu as pltpu


def _pixel_noise_apply_kernel(level_ref, noise_ref, x_ref, o_ref):
    # level_ref: (1,) f32 in SMEM; noise_ref: (TILE_H, W) f32 uniform [0,1)
    # x_ref / o_ref: (C, TILE_H, W) in the input dtype.
    # Scale the per-pixel noise once per spatial tile, reuse across all bands.
    scaled = (noise_ref[...] * level_ref[0]).astype(o_ref.dtype)
    o_ref[...] = x_ref[...] + scaled[None, :, :]


def _pick_tile_h(C, H, W, itemsize):
    # Target ~2 MiB per x block so 2x(in+out) double-buffered tiles plus the
    # (TILE_H, W) noise tile stay comfortably inside scoped VMEM everywhere.
    target_bytes = 2 * 1024 * 1024
    max_rows = max(8, target_bytes // max(1, C * W * itemsize))
    for cand in (512, 256, 128, 64, 32, 16, 8):
        if cand <= max_rows and H % cand == 0:
            return cand
    return H  # full-H block is always a legal block shape


def pixel_noise(x, key, std_noise=0.1):
    """x: (C, H, W) float array. Returns x + per-pixel uniform noise * (std(x)*std_noise)."""
    C, H, W = x.shape
    itemsize = jnp.dtype(x.dtype).itemsize

    # Phase 1 (wrapper): global unbiased std (matches torch.Tensor.std default)
    # and the shared per-pixel uniform noise (jax.random equivalent of torch.rand).
    noise_level = (jnp.std(x.astype(jnp.float32), ddof=1)
                   * jnp.float32(std_noise)).reshape(1)
    pixel_noise_hw = jax.random.uniform(key, (H, W), dtype=jnp.float32)

    # Phase 2: tiled, pipelined elementwise apply kernel.
    tile_h = _pick_tile_h(C, H, W, itemsize)
    grid = (H // tile_h,)

    cost = pl.CostEstimate(
        flops=2 * C * H * W,
        transcendentals=0,
        bytes_accessed=2 * C * H * W * itemsize + H * W * 4,
    )

    return pl.pallas_call(
        _pixel_noise_apply_kernel,
        out_shape=jax.ShapeDtypeStruct((C, H, W), x.dtype),
        grid=grid,
        in_specs=[
            pl.BlockSpec(memory_space=pltpu.MemorySpace.SMEM),      # noise_level scalar
            pl.BlockSpec((tile_h, W), lambda i: (i, 0)),            # (H, W) noise tile
            pl.BlockSpec((C, tile_h, W), lambda i: (0, i, 0)),      # x tile
        ],
        out_specs=pl.BlockSpec((C, tile_h, W), lambda i: (0, i, 0)),
        compiler_params=pltpu.CompilerParams(
            dimension_semantics=("parallel",),
        ),
        cost_estimate=cost,
    )(noise_level, pixel_noise_hw, x)


if __name__ == "__main__":
    key = jax.random.PRNGKey(0)
    kx, kn = jax.random.split(key)
    C, H, W = 4, 16, 128  # small CHW input; W=128 keeps the lane axis dense
    x = jax.random.normal(kx, (C, H, W), dtype=jnp.float32)

    out = jax.block_until_ready(pixel_noise(x, kn, std_noise=0.1))

    # Sanity checks on semantics.
    assert out.shape == x.shape and out.dtype == x.dtype
    resid = out - x
    # Noise must be identical across the channel (band) axis.
    assert float(jnp.max(jnp.abs(resid - resid[0:1]))) < 1e-5
    # Noise magnitude bounded by noise_level = std(x, unbiased) * 0.1.
    level = float(jnp.std(x, ddof=1)) * 0.1
    assert float(jnp.min(resid)) >= -1e-6 and float(jnp.max(resid)) <= level + 1e-5
    # Exact reference: same RNG stream as the wrapper uses.
    noise_hw = jax.random.uniform(kn, (H, W), dtype=jnp.float32)
    ref = x + noise_hw[None, :, :] * (jnp.std(x, ddof=1) * 0.1)
    assert float(jnp.max(jnp.abs(out - ref))) < 1e-5

    print("KERNEL_OK")
</pallas_src>

<mosaic_0001>
module attributes {stable_mosaic.version = 11 : i64} {
  func.func @_pixel_noise_apply_kernel(%arg0: i32, %arg1: memref<1xf32, #tpu.memory_space<smem>>, %arg2: memref<16x128xf32, #tpu.memory_space<vmem>>, %arg3: memref<4x16x128xf32, #tpu.memory_space<vmem>>, %arg4: memref<4x16x128xf32, #tpu.memory_space<vmem>>) attributes {dimension_semantics = [#tpu.dimension_semantics<parallel>], iteration_bounds = array<i64: 1>, scalar_prefetch = 0 : i64, scratch_operands = 0 : i64, tpu.core_type = #tpu.core_type<tc>, window_params = [{transform_indices = @transform_0, window_bounds = array<i64: 1>}, {transform_indices = @transform_1, window_bounds = array<i64: 16, 128>}, {transform_indices = @transform_2, window_bounds = array<i64: 4, 16, 128>}, {transform_indices = @transform_3, window_bounds = array<i64: 4, 16, 128>}]} {
    %c0 = arith.constant 0 : index
    %c0_0 = arith.constant 0 : index
    %0 = vector.load %arg2[%c0, %c0_0] : memref<16x128xf32, #tpu.memory_space<vmem>>, vector<16x128xf32>
    %c0_1 = arith.constant 0 : index
    %1 = memref.load %arg1[%c0_1] : memref<1xf32, #tpu.memory_space<smem>>
    %2 = vector.broadcast %1 : f32 to vector<16x128xf32>
    %3 = arith.mulf %0, %2 : vector<16x128xf32>
    %c0_2 = arith.constant 0 : index
    %c0_3 = arith.constant 0 : index
    %c0_4 = arith.constant 0 : index
    %4 = vector.load %arg3[%c0_2, %c0_3, %c0_4] : memref<4x16x128xf32, #tpu.memory_space<vmem>>, vector<4x16x128xf32>
    %5 = vector.shape_cast %3 : vector<16x128xf32> to vector<1x16x128xf32>
    %6 = vector.broadcast %5 : vector<1x16x128xf32> to vector<4x16x128xf32>
    %7 = arith.addf %4, %6 : vector<4x16x128xf32>
    %c0_5 = arith.constant 0 : index
    %c0_6 = arith.constant 0 : index
    %c0_7 = arith.constant 0 : index
    %8 = vector.load %arg4[%c0_5, %c0_6, %c0_7] : memref<4x16x128xf32, #tpu.memory_space<vmem>>, vector<4x16x128xf32>
    tpu.vector_store %arg4[%c0_5, %c0_6, %c0_7], %7 {strides = array<i32>} : memref<4x16x128xf32, #tpu.memory_space<vmem>>, vector<4x16x128xf32>,
    return
  }
  func.func @transform_0(%arg0: i32) -> i32 {
    %c0_i32 = arith.constant 0 : i32
    %c0_i32_0 = arith.constant 0 : i32
    return %c0_i32 : i32
  }
  func.func @transform_1(%arg0: i32) -> (i32, i32) {
    %c0_i32 = arith.constant 0 : i32
    %c0_i32_0 = arith.constant 0 : i32
    return %arg0, %c0_i32 : i32, i32
  }
  func.func @transform_2(%arg0: i32) -> (i32, i32, i32) {
    %c0_i32 = arith.constant 0 : i32
    %c0_i32_0 = arith.constant 0 : i32
    %c0_i32_1 = arith.constant 0 : i32
    return %c0_i32, %arg0, %c0_i32_0 : i32, i32, i32
  }
  func.func @transform_3(%arg0: i32) -> (i32, i32, i32) {
    %c0_i32 = arith.constant 0 : i32
    %c0_i32_0 = arith.constant 0 : i32
    %c0_i32_1 = arith.constant 0 : i32
    return %c0_i32, %arg0, %c0_i32_0 : i32, i32, i32
  }
}

</mosaic_0001>

<llo_original>
// kernel: tpu_custom_call.1
$region0: #{tpu_custom_call.1}
  #allocation0 [shape = 'u32[]', space=smem, size = 0x4, offset = 0x4, fixed_abs, tag = 'smem constant byte address 0x4 - core index']
  #allocation1 [shape = 'u32[72,128]{1,0:T(1,128)}', space=vmem, size = 0x9000, scoped, tag = 'internal scratch']
  #allocation2 [shape = 'f32[1]{0:T(128)S(6)}', space=smem, size = 0x200, scoped, tag = 'scoped memory for tpu_custom_call.1']
  %s0 = inlined_call_operand.<no memory space> [shape: f32[1], index: 0, kind: input, shape index: {}]
  %s1 = inlined_call_operand.hbm [shape: f32[16,128], index: 1, kind: input, shape index: {}]
  %s2 = inlined_call_operand.hbm [shape: f32[4,16,128], index: 2, kind: input, shape index: {}]
  %s3 = inlined_call_operand.hbm [shape: f32[4,16,128], index: 3, kind: output, shape index: {}]
  %s4 = sld [smem:[#allocation0]]
  $region30: #{tpu_custom_call.1} parent=0
    _
  %s6 = ssub.s32 1, %s4
  %s7 = scalar_select 0, %s6, %s4
  %8 = sst [smem:[#allocation2]] %s0
  $region1: #{tpu_custom_call.1} parent=0
    #allocation3 [shape = 'u8[8192]{0}', space=vmem, size = 0x2000, scoped, tag = 'input window, operand 1, single buffered']
    #allocation4 [shape = 's32[1]{0}', space=sflag, size = 0x4, scoped, tag = 'scoped memory for tpu_custom_call.1']
    #allocation5 [shape = 's32[1]{0}', space=sflag, size = 0x4, scoped, tag = 'scoped memory for tpu_custom_call.1']
    #allocation6 [shape = 'u8[32768]{0}', space=vmem, size = 0x8000, scoped, tag = 'input window, operand 2, single buffered']
    #allocation7 [shape = 's32[1]{0}', space=sflag, size = 0x4, scoped, tag = 'scoped memory for tpu_custom_call.1']
    #allocation8 [shape = 'u8[32768]{0}', space=vmem, size = 0x8000, scoped, tag = 'output window, operand 0, single buffered']
    %9 = vsyncpa [#allocation4], 0
    %10 = vsyncpa [#allocation7], 0
    %11 = vsyncpa [#allocation5], 0
    // Predicated region
    $region2: #{tpu_custom_call.1} parent=1 // pred_check
      _
    $region3: #{tpu_custom_call.1} parent=1 // pred_check_branch
      %13 = sbr.rel (0) target = $region5
    $region4: #{tpu_custom_call.1} parent=1 // pred_region
      _
    $region5: #{tpu_custom_call.1} parent=1 // pred_fallthru
      _
    // Predicated region
    $region6: #{tpu_custom_call.1} parent=1 // pred_check
      _
    $region7: #{tpu_custom_call.1} parent=1 // pred_check_branch
      %15 = sbr.rel (0) target = $region9
    $region8: #{tpu_custom_call.1} parent=1 // pred_region
      %17 = vsyncadd [#allocation4], 0
      %s18 = sshll.u32 %s1, 4
      %s19 = int_to_ptr.hbm [resolvable:$true] %s18
      %s20 = sshll.u32 [#allocation3], 4
      %s21 = int_to_ptr.vmem [resolvable:$true] %s20
      %26 = dma.hbm_to_vmem [thread:$0]  %s19, 256, %s21, [#allocation4], 128, 128, 8
    $region9: #{tpu_custom_call.1} parent=1 // pred_fallthru
      _
    // Predicated region
    $region10: #{tpu_custom_call.1} parent=1 // pred_check
      _
    $region11: #{tpu_custom_call.1} parent=1 // pred_check_branch
      %28 = sbr.rel (0) target = $region13
    $region12: #{tpu_custom_call.1} parent=1 // pred_region
      %30 = vsyncadd [#allocation7], 0
      %s31 = sshll.u32 %s2, 4
      %s32 = int_to_ptr.hbm [resolvable:$true] %s31
      %s33 = sshll.u32 [#allocation6], 4
      %s34 = int_to_ptr.vmem [resolvable:$true] %s33
      %39 = dma.hbm_to_vmem [thread:$0]  %s32, 1024, %s34, [#allocation7], 128, 128, 8
    $region13: #{tpu_custom_call.1} parent=1 // pred_fallthru
      _
    // Predicated region
    $region14: #{tpu_custom_call.1} parent=1 // pred_check
      _
    $region15: #{tpu_custom_call.1} parent=1 // pred_check_branch
      %41 = sbr.rel (0) target = $region17
    $region16: #{tpu_custom_call.1} parent=1 // pred_region
      %43 = dma.done [#allocation4], 256
    $region17: #{tpu_custom_call.1} parent=1 // pred_fallthru
      _
    // Predicated region
    $region18: #{tpu_custom_call.1} parent=1 // pred_check
      _
    $region19: #{tpu_custom_call.1} parent=1 // pred_check_branch
      %45 = sbr.rel (0) target = $region21
    $region20: #{tpu_custom_call.1} parent=1 // pred_region
      %47 = dma.done [#allocation7], 1024
    $region21: #{tpu_custom_call.1} parent=1 // pred_fallthru
      _
    %v48 = vld [vmem:[#allocation3] sm:$0xff]
    %v49 = vld [vmem:[#allocation3 + $0x8] sm:$0xff]
    %s50 = sld [smem:[#allocation2]]
    %v51 = vstv %s50
    %v52 = vmul.f32 %v48, %v51
    %v53 = vmul.f32 %v49, %v51
    %v54 = vld [vmem:[#allocation6] sm:$0xff]
    %v55 = vld [vmem:[#allocation6 + $0x8] sm:$0xff]
    %v56 = vld [vmem:[#allocation6 + $0x10] sm:$0xff]
    %v57 = vld [vmem:[#allocation6 + $0x18] sm:$0xff]
    %v58 = vld [vmem:[#allocation6 + $0x20] sm:$0xff]
    %v59 = vld [vmem:[#allocation6 + $0x28] sm:$0xff]
    %v60 = vld [vmem:[#allocation6 + $0x30] sm:$0xff]
    %v61 = vld [vmem:[#allocation6 + $0x38] sm:$0xff]
    %v62 = vadd.f32 %v54, %v52
    %v63 = vadd.f32 %v55, %v53
    %v64 = vadd.f32 %v56, %v52
    %v65 = vadd.f32 %v57, %v53
    %v66 = vadd.f32 %v58, %v52
    %v67 = vadd.f32 %v59, %v53
    %v68 = vadd.f32 %v60, %v52
    %v69 = vadd.f32 %v61, %v53
    %70 = vst [vmem:[#allocation8] sm:$0xff] %v62
    %71 = vst [vmem:[#allocation8 + $0x8] sm:$0xff] %v63
    %72 = vst [vmem:[#allocation8 + $0x10] sm:$0xff] %v64
    %73 = vst [vmem:[#allocation8 + $0x18] sm:$0xff] %v65
    %74 = vst [vmem:[#allocation8 + $0x20] sm:$0xff] %v66
    %75 = vst [vmem:[#allocation8 + $0x28] sm:$0xff] %v67
    %76 = vst [vmem:[#allocation8 + $0x30] sm:$0xff] %v68
    %77 = vst [vmem:[#allocation8 + $0x38] sm:$0xff] %v69
    // Predicated region
    $region22: #{tpu_custom_call.1} parent=1 // pred_check
      _
    $region23: #{tpu_custom_call.1} parent=1 // pred_check_branch
      %79 = sbr.rel (0) target = $region25
    $region24: #{tpu_custom_call.1} parent=1 // pred_region
      %81 = vsyncadd [#allocation5], 0
      %s82 = sshll.u32 [#allocation8], 4
      %s83 = int_to_ptr.vmem [resolvable:$true] %s82
      %s84 = sshll.u32 %s3, 4
      %s85 = int_to_ptr.hbm [resolvable:$true] %s84
      %90 = dma.vmem_to_hbm [thread:$0]  %s83, 1024, %s85, [#allocation5], 128, 128, 8
    $region25: #{tpu_custom_call.1} parent=1 // pred_fallthru
      _
    // Predicated region
    $region26: #{tpu_custom_call.1} parent=1 // pred_check
      _
    $region27: #{tpu_custom_call.1} parent=1 // pred_check_branch
      %92 = sbr.rel (0) target = $region29
    $region28: #{tpu_custom_call.1} parent=1 // pred_region
      %94 = dma.done [#allocation5], 1024
    $region29: #{tpu_custom_call.1} parent=1 // pred_fallthru
      _
    %95 = vsyncpa [#allocation4], 1
    %96 = vsyncpa [#allocation7], 1
    %97 = vsyncpa [#allocation5], 1

</llo_original>
